<compile_context>
chip_gen: v5e
topology: v5e:2x2
jax: 0.10.0
libtpu: 0.0.40
codegen_flags: <defaults>
</compile_context>

<pallas_src>
import functools
import math

import jax
import jax.numpy as jnp
from jax.experimental import pallas as pl
from jax.experimental.pallas import tpu as pltpu

HIDDEN = 200
NUM_CLASSES = 10
HIDDEN_PAD = 256      # lane-dense padding of the 200-wide hidden dim (2 x 128 lanes)
CLASSES_PAD = 128     # lane-dense padding of the 10-class output   (1 x 128 lanes)
NEG_BIG = -1e30       # bias pad so padded class logits contribute exp(.) == 0


def _round_up(n, m):
    return ((n + m - 1) // m) * m


# --------------------------------------------------------------------------- kernels
def _softmax_lanes(logits):
    """Row softmax over the (lane-dense, padded) class axis.  Exact normalization."""
    m = jnp.max(logits, axis=1, keepdims=True)     # padded logits are -1e30
    e = jnp.exp(logits - m)
    return e / jnp.sum(e, axis=1, keepdims=True)


def _fused_kernel(x_ref, w1_ref, b1_ref, w1cs_ref, w2_ref, b2_ref, w2cs_ref,
                  w3_ref, b3_ref, hidden_ref, conf_ref, *, batch, features):
    """Whole forward in one launch (small batch): means computed in-kernel."""
    x = x_ref[...]
    # Global scalar mean(x): padded rows/cols of x are exactly zero.
    mean_x = jnp.sum(x.astype(jnp.float32)) * (1.0 / (batch * features))
    b1_eff = b1_ref[...] - mean_x * w1cs_ref[...]          # fold centering into bias

    h1 = jnp.dot(x.astype(w1_ref.dtype), w1_ref[...],
                 preferred_element_type=jnp.float32) + b1_eff
    h1 = jnp.maximum(h1, 0.0)

    # Global scalar mean(h1) over the *logical* block: mask padded rows;
    # padded hidden columns are exactly 0 (zero W1 cols, zero effective bias).
    rows = jax.lax.broadcasted_iota(jnp.int32, h1.shape, 0)
    mean_h1 = jnp.sum(jnp.where(rows < batch, h1, 0.0)) * (1.0 / (batch * HIDDEN))
    b2_eff = b2_ref[...] - mean_h1 * w2cs_ref[...]

    h2 = jnp.dot(h1.astype(w2_ref.dtype), w2_ref[...],
                 preferred_element_type=jnp.float32) + b2_eff
    h2 = jnp.maximum(h2, 0.0)
    hidden_ref[...] = h2.astype(hidden_ref.dtype)

    logits = jnp.dot(h2.astype(w3_ref.dtype), w3_ref[...],
                     preferred_element_type=jnp.float32) + b3_ref[...]
    conf_ref[...] = _softmax_lanes(logits).astype(conf_ref.dtype)


def _layer1_kernel(x_ref, w1_ref, b1e_ref, h1_ref, psum_ref, *, batch, tb):
    """h1 = relu(x @ W1 + b1_eff); also emit the per-tile partial sum of logical h1."""
    i = pl.program_id(0)
    h1 = jnp.dot(x_ref[...].astype(w1_ref.dtype), w1_ref[...],
                 preferred_element_type=jnp.float32) + b1e_ref[...]
    h1 = jnp.maximum(h1, 0.0)

    # Partial sum over the logical rows/cols of this tile (padded cols are 0).
    rows = i * tb + jax.lax.broadcasted_iota(jnp.int32, h1.shape, 0)
    tile_sum = jnp.sum(jnp.where(rows < batch, h1, 0.0))
    psum_ref[...] = jnp.zeros((1, 8, 128), jnp.float32) + tile_sum

    h1_ref[...] = h1.astype(h1_ref.dtype)


def _layer23_kernel(h1_ref, w2_ref, b2e_ref, w3_ref, b3_ref, hidden_ref, conf_ref):
    """hidden = relu(h1 @ W2 + b2_eff); conf = softmax(hidden @ W3 + b3)."""
    h2 = jnp.dot(h1_ref[...].astype(w2_ref.dtype), w2_ref[...],
                 preferred_element_type=jnp.float32) + b2e_ref[...]
    h2 = jnp.maximum(h2, 0.0)
    hidden_ref[...] = h2.astype(hidden_ref.dtype)

    logits = jnp.dot(h2.astype(w3_ref.dtype), w3_ref[...],
                     preferred_element_type=jnp.float32) + b3_ref[...]
    conf_ref[...] = _softmax_lanes(logits).astype(conf_ref.dtype)


# --------------------------------------------------------------------- pallas wrappers
def _pallas_fused(x_in, p, batch, features):
    bp, fp = x_in.shape
    kern = functools.partial(_fused_kernel, batch=batch, features=features)
    return pl.pallas_call(
        kern,
        out_shape=(jax.ShapeDtypeStruct((bp, HIDDEN_PAD), jnp.float32),
                   jax.ShapeDtypeStruct((bp, CLASSES_PAD), jnp.float32)),
        grid=(1,),
        in_specs=[
            pl.BlockSpec((bp, fp), lambda i: (0, 0)),                   # x (whole batch)
            pl.BlockSpec((fp, HIDDEN_PAD), lambda i: (0, 0)),           # W1
            pl.BlockSpec((1, HIDDEN_PAD), lambda i: (0, 0)),            # b1
            pl.BlockSpec((1, HIDDEN_PAD), lambda i: (0, 0)),            # colsum(W1)
            pl.BlockSpec((HIDDEN_PAD, HIDDEN_PAD), lambda i: (0, 0)),   # W2
            pl.BlockSpec((1, HIDDEN_PAD), lambda i: (0, 0)),            # b2
            pl.BlockSpec((1, HIDDEN_PAD), lambda i: (0, 0)),            # colsum(W2)
            pl.BlockSpec((HIDDEN_PAD, CLASSES_PAD), lambda i: (0, 0)),  # W3
            pl.BlockSpec((1, CLASSES_PAD), lambda i: (0, 0)),           # b3
        ],
        out_specs=(pl.BlockSpec((bp, HIDDEN_PAD), lambda i: (0, 0)),
                   pl.BlockSpec((bp, CLASSES_PAD), lambda i: (0, 0))),
    )(x_in, p["w1"], p["b1"], p["w1_colsum"], p["w2"], p["b2"], p["w2_colsum"],
      p["w3"], p["b3"])


def _pallas_layer1(x_in, w1, b1_eff, *, batch, tb, h1_dtype):
    bp, fp = x_in.shape
    nb = bp // tb
    kern = functools.partial(_layer1_kernel, batch=batch, tb=tb)
    cost = pl.CostEstimate(
        flops=2 * bp * fp * HIDDEN_PAD, transcendentals=0,
        bytes_accessed=x_in.dtype.itemsize * bp * fp
        + w1.dtype.itemsize * fp * HIDDEN_PAD
        + jnp.dtype(h1_dtype).itemsize * bp * HIDDEN_PAD)
    return pl.pallas_call(
        kern,
        out_shape=(jax.ShapeDtypeStruct((bp, HIDDEN_PAD), h1_dtype),
                   jax.ShapeDtypeStruct((nb, 8, 128), jnp.float32)),  # per-tile sums
        grid=(nb,),
        in_specs=[
            pl.BlockSpec((tb, fp), lambda i: (i, 0)),                 # x tile
            pl.BlockSpec((fp, HIDDEN_PAD), lambda i: (0, 0)),         # W1 resident
            pl.BlockSpec((1, HIDDEN_PAD), lambda i: (0, 0)),          # b1_eff resident
        ],
        out_specs=(pl.BlockSpec((tb, HIDDEN_PAD), lambda i: (i, 0)),
                   pl.BlockSpec((1, 8, 128), lambda i: (i, 0, 0))),
        compiler_params=pltpu.CompilerParams(dimension_semantics=("parallel",)),
        cost_estimate=cost,
    )(x_in, w1, b1_eff)


def _pallas_layer23(h1, w2, b2_eff, w3, b3, *, tb):
    bp = h1.shape[0]
    nb = bp // tb
    cost = pl.CostEstimate(
        flops=2 * bp * HIDDEN_PAD * (HIDDEN_PAD + CLASSES_PAD),
        transcendentals=bp * CLASSES_PAD,
        bytes_accessed=h1.dtype.itemsize * bp * HIDDEN_PAD
        + w2.dtype.itemsize * (HIDDEN_PAD * HIDDEN_PAD + HIDDEN_PAD * CLASSES_PAD)
        + 4 * bp * (HIDDEN_PAD + CLASSES_PAD))
    return pl.pallas_call(
        _layer23_kernel,
        out_shape=(jax.ShapeDtypeStruct((bp, HIDDEN_PAD), jnp.float32),   # hidden
                   jax.ShapeDtypeStruct((bp, CLASSES_PAD), jnp.float32)), # confidence
        grid=(nb,),
        in_specs=[
            pl.BlockSpec((tb, HIDDEN_PAD), lambda i: (i, 0)),             # h1 tile
            pl.BlockSpec((HIDDEN_PAD, HIDDEN_PAD), lambda i: (0, 0)),     # W2 resident
            pl.BlockSpec((1, HIDDEN_PAD), lambda i: (0, 0)),              # b2_eff
            pl.BlockSpec((HIDDEN_PAD, CLASSES_PAD), lambda i: (0, 0)),    # W3 resident
            pl.BlockSpec((1, CLASSES_PAD), lambda i: (0, 0)),             # b3
        ],
        out_specs=(pl.BlockSpec((tb, HIDDEN_PAD), lambda i: (i, 0)),
                   pl.BlockSpec((tb, CLASSES_PAD), lambda i: (i, 0))),
        compiler_params=pltpu.CompilerParams(dimension_semantics=("parallel",)),
        cost_estimate=cost,
    )(h1, w2, b2_eff, w3, b3)


def multi_layer_classifier(x, padded_params, *, block_b=512, fuse_max_rows=1024):
    """x: (B, F) float32.  padded_params: output of pad_params()."""
    p = padded_params
    B, F = x.shape
    fp = p["w1"].shape[0]          # feature dim padded to a multiple of 128
    mxu_dtype = p["w1"].dtype
    bp8 = _round_up(B, 8)

    def pad_x(bp):
        if bp != B or fp != F:
            return jnp.zeros((bp, fp), mxu_dtype).at[:B, :F].set(x.astype(mxu_dtype))
        return x   # already aligned: feed as-is, cast happens in-kernel

    # ---------------- fused single-launch path (small / inference batches) ----------
    if bp8 <= fuse_max_rows:
        x_in = pad_x(bp8)
        hidden_p, conf_p = _pallas_fused(x_in, p, B, F)
        return hidden_p[:B, :HIDDEN], conf_p[:B, :NUM_CLASSES]

    # ---------------- tiled two-pass path (large batches) ---------------------------
    # Batch tile: multiple of 8 sublanes, capped so there are >= 2 tiles (v7x megacore).
    tb = _round_up(min(block_b, max(8, (bp8 + 1) // 2)), 8)
    bp = _round_up(bp8, tb)
    x_in = pad_x(bp)

    # Fold the global mean(x) into the layer-1 bias (exact by linearity).
    mean_x = jnp.mean(x.astype(jnp.float32))
    b1_eff = p["b1"] - mean_x * p["w1_colsum"]

    # Pass 1: h1 (stored in the MXU dtype) + per-tile partial sums of logical h1.
    h1, psums = _pallas_layer1(x_in, p["w1"], b1_eff, batch=B, tb=tb,
                               h1_dtype=mxu_dtype)

    # Fold the global mean(h1) (from tile sums; no HBM re-read of h1) into bias 2.
    mean_h1 = jnp.sum(psums[:, 0, 0]) * (1.0 / (B * HIDDEN))
    b2_eff = p["b2"] - mean_h1 * p["w2_colsum"]

    # Pass 2: layers 2 + 3 (+ softmax).
    hidden_p, conf_p = _pallas_layer23(h1, p["w2"], b2_eff, p["w3"], p["b3"], tb=tb)

    return hidden_p[:B, :HIDDEN], conf_p[:B, :NUM_CLASSES]


# ----------------------------------------------------------------------- params
def init_params(key, input_features):
    """Deterministic init mirroring torch.nn.Linear's U(-1/sqrt(fan_in), ...)."""
    ks = jax.random.split(key, 6)

    def linear(kw, kb, fan_in, fan_out):
        bound = 1.0 / math.sqrt(fan_in)
        w = jax.random.uniform(kw, (fan_in, fan_out), jnp.float32, -bound, bound)
        b = jax.random.uniform(kb, (1, fan_out), jnp.float32, -bound, bound)
        return w, b

    w1, b1 = linear(ks[0], ks[1], input_features, HIDDEN)
    w2, b2 = linear(ks[2], ks[3], HIDDEN, HIDDEN)
    w3, b3 = linear(ks[4], ks[5], HIDDEN, NUM_CLASSES)
    return {"w1": w1, "b1": b1, "w2": w2, "b2": b2, "w3": w3, "b3": b3}


def pad_params(params, *, mxu_dtype=jnp.bfloat16):
    """Pad weights to lane-dense shapes + precompute column sums for bias folding.
    Default mxu_dtype=bfloat16 (full-rate MXU on v5e/v6e/v7x); biases, column sums
    and all accumulation stay f32.  Use mxu_dtype=jnp.float32 for exact numerics."""
    F = params["w1"].shape[0]
    fp = _round_up(F, 128)
    w1 = jnp.zeros((fp, HIDDEN_PAD), jnp.float32).at[:F, :HIDDEN].set(params["w1"])
    b1 = jnp.zeros((1, HIDDEN_PAD), jnp.float32).at[:, :HIDDEN].set(params["b1"])
    w2 = jnp.zeros((HIDDEN_PAD, HIDDEN_PAD), jnp.float32).at[:HIDDEN, :HIDDEN].set(params["w2"])
    b2 = jnp.zeros((1, HIDDEN_PAD), jnp.float32).at[:, :HIDDEN].set(params["b2"])
    w3 = jnp.zeros((HIDDEN_PAD, CLASSES_PAD), jnp.float32).at[:HIDDEN, :NUM_CLASSES].set(params["w3"])
    b3 = jnp.full((1, CLASSES_PAD), NEG_BIG, jnp.float32).at[:, :NUM_CLASSES].set(params["b3"])
    # Column sums over padded rows == over logical rows (padded rows are zero);
    # computed from the f32 weights, kept f32 (bias path).
    w1_colsum = jnp.sum(w1, axis=0, keepdims=True)
    w2_colsum = jnp.sum(w2, axis=0, keepdims=True)
    return {"w1": w1.astype(mxu_dtype), "b1": b1, "w1_colsum": w1_colsum,
            "w2": w2.astype(mxu_dtype), "b2": b2, "w2_colsum": w2_colsum,
            "w3": w3.astype(mxu_dtype), "b3": b3}


def _reference(x, p):
    """Pure-JAX f32 reference (logical shapes) for correctness check."""
    x = x - jnp.mean(x)
    h1 = jnp.maximum(x @ p["w1"] + p["b1"], 0.0)
    h1 = h1 - jnp.mean(h1)
    h2 = jnp.maximum(h1 @ p["w2"] + p["b2"], 0.0)
    logits = h2 @ p["w3"] + p["b3"]
    return h2, jax.nn.softmax(logits, axis=1)


if __name__ == "__main__":
    key = jax.random.PRNGKey(0)
    k_x, k_p, k_x2 = jax.random.split(key, 3)

    batch, input_features = 4, 32
    x = jax.random.normal(k_x, (batch, input_features), jnp.float32)
    params = init_params(k_p, input_features)
    h_ref, c_ref = _reference(x, params)

    # --- 1) fused small-batch path, exact f32 MXU path --------------------------------
    padded_f32 = pad_params(params, mxu_dtype=jnp.float32)
    hidden, confidence = jax.jit(multi_layer_classifier)(x, padded_f32)
    jax.block_until_ready((hidden, confidence))
    assert hidden.shape == (batch, HIDDEN)
    assert confidence.shape == (batch, NUM_CLASSES)
    assert jnp.allclose(hidden, h_ref, atol=1e-3, rtol=1e-3), "hidden mismatch (f32 fused)"
    assert jnp.allclose(confidence, c_ref, atol=1e-3, rtol=1e-3), "confidence mismatch (f32 fused)"
    assert jnp.allclose(jnp.sum(confidence, axis=1), 1.0, atol=1e-4)

    # --- 2) fused path, default bf16 MXU path (looser tolerances: bf16 casts) ---------
    padded_bf16 = pad_params(params)
    hidden_bf, conf_bf = jax.jit(multi_layer_classifier)(x, padded_bf16)
    jax.block_until_ready((hidden_bf, conf_bf))
    assert jnp.allclose(hidden_bf, h_ref, atol=1e-1, rtol=1e-1), "hidden mismatch (bf16 fused)"
    assert jnp.allclose(conf_bf, c_ref, atol=1e-1), "confidence mismatch (bf16 fused)"
    assert jnp.allclose(jnp.sum(conf_bf, axis=1), 1.0, atol=1e-3)

    # --- 3) tiled two-pass path (forced), exact f32 MXU path, masked last tile --------
    batch2 = 72
    x2 = jax.random.normal(k_x2, (batch2, input_features), jnp.float32)
    h_ref2, c_ref2 = _reference(x2, params)
    run_tiled = jax.jit(functools.partial(multi_layer_classifier,
                                          block_b=32, fuse_max_rows=0))
    hidden2, conf2 = run_tiled(x2, padded_f32)
    jax.block_until_ready((hidden2, conf2))
    assert hidden2.shape == (batch2, HIDDEN)
    assert conf2.shape == (batch2, NUM_CLASSES)
    assert jnp.allclose(hidden2, h_ref2, atol=1e-3, rtol=1e-3), "hidden mismatch (tiled)"
    assert jnp.allclose(conf2, c_ref2, atol=1e-3, rtol=1e-3), "confidence mismatch (tiled)"

    print("KERNEL_OK")
</pallas_src>

<mosaic_0001>
module attributes {stable_mosaic.version = 11 : i64} {
  func.func @_fused_kernel(%arg0: i32, %arg1: memref<8x128xf32, #tpu.memory_space<vmem>>, %arg2: memref<128x256xf32, #tpu.memory_space<vmem>>, %arg3: memref<1x256xf32, #tpu.memory_space<vmem>>, %arg4: memref<1x256xf32, #tpu.memory_space<vmem>>, %arg5: memref<256x256xf32, #tpu.memory_space<vmem>>, %arg6: memref<1x256xf32, #tpu.memory_space<vmem>>, %arg7: memref<1x256xf32, #tpu.memory_space<vmem>>, %arg8: memref<256x128xf32, #tpu.memory_space<vmem>>, %arg9: memref<1x128xf32, #tpu.memory_space<vmem>>, %arg10: memref<8x256xf32, #tpu.memory_space<vmem>>, %arg11: memref<8x128xf32, #tpu.memory_space<vmem>>) attributes {dimension_semantics = [#tpu.dimension_semantics<arbitrary>], iteration_bounds = array<i64: 1>, scalar_prefetch = 0 : i64, scratch_operands = 0 : i64, tpu.core_type = #tpu.core_type<tc>, window_params = [{pipeline_mode = #tpu.pipeline_mode<synchronous>, transform_indices = @transform_0, window_bounds = array<i64: 8, 128>}, {pipeline_mode = #tpu.pipeline_mode<synchronous>, transform_indices = @transform_1, window_bounds = array<i64: 128, 256>}, {pipeline_mode = #tpu.pipeline_mode<synchronous>, transform_indices = @transform_2, window_bounds = array<i64: 1, 256>}, {pipeline_mode = #tpu.pipeline_mode<synchronous>, transform_indices = @transform_3, window_bounds = array<i64: 1, 256>}, {pipeline_mode = #tpu.pipeline_mode<synchronous>, transform_indices = @transform_4, window_bounds = array<i64: 256, 256>}, {pipeline_mode = #tpu.pipeline_mode<synchronous>, transform_indices = @transform_5, window_bounds = array<i64: 1, 256>}, {pipeline_mode = #tpu.pipeline_mode<synchronous>, transform_indices = @transform_6, window_bounds = array<i64: 1, 256>}, {pipeline_mode = #tpu.pipeline_mode<synchronous>, transform_indices = @transform_7, window_bounds = array<i64: 256, 128>}, {pipeline_mode = #tpu.pipeline_mode<synchronous>, transform_indices = @transform_8, window_bounds = array<i64: 1, 128>}, {pipeline_mode = #tpu.pipeline_mode<synchronous>, transform_indices = @transform_9, window_bounds = array<i64: 8, 256>}, {pipeline_mode = #tpu.pipeline_mode<synchronous>, transform_indices = @transform_10, window_bounds = array<i64: 8, 128>}]} {
    %c0 = arith.constant 0 : index
    %c0_0 = arith.constant 0 : index
    %0 = vector.load %arg1[%c0, %c0_0] : memref<8x128xf32, #tpu.memory_space<vmem>>, vector<8x128xf32>
    %1 = vector.shape_cast %0 : vector<8x128xf32> to vector<1x8x128xf32>
    %cst = arith.constant dense<0.000000e+00> : vector<1xf32>
    %2 = vector.multi_reduction <add>, %1, %cst [1, 2] : vector<1x8x128xf32> to vector<1xf32>
    %3 = vector.shape_cast %2 : vector<1xf32> to vector<1x1x1xf32>
    %4 = vector.extract %3[0, 0, 0] : f32 from vector<1x1x1xf32>
    %cst_1 = arith.constant 7.812500e-03 : f32
    %5 = arith.mulf %4, %cst_1 : f32
    %c0_2 = arith.constant 0 : index
    %c0_3 = arith.constant 0 : index
    %6 = vector.load %arg3[%c0_2, %c0_3] : memref<1x256xf32, #tpu.memory_space<vmem>>, vector<1x256xf32>
    %c0_4 = arith.constant 0 : index
    %c0_5 = arith.constant 0 : index
    %7 = vector.load %arg4[%c0_4, %c0_5] : memref<1x256xf32, #tpu.memory_space<vmem>>, vector<1x256xf32>
    %8 = vector.broadcast %5 : f32 to vector<1x256xf32>
    %9 = arith.mulf %8, %7 : vector<1x256xf32>
    %10 = arith.subf %6, %9 : vector<1x256xf32>
    %c0_6 = arith.constant 0 : index
    %c0_7 = arith.constant 0 : index
    %11 = vector.load %arg2[%c0_6, %c0_7] : memref<128x256xf32, #tpu.memory_space<vmem>>, vector<128x256xf32>
    %cst_8 = arith.constant dense<0.000000e+00> : vector<8x256xf32>
    %12 = tpu.matmul %0, %11, %cst_8 {dimension_numbers = #tpu.dot_dimension_numbers<[1], [0], [0], [1], [0, 0, 1, 1], [], []>} : vector<8x128xf32>, vector<128x256xf32>, vector<8x256xf32> -> vector<8x256xf32>
    %13 = vector.broadcast %10 : vector<1x256xf32> to vector<8x256xf32>
    %14 = arith.addf %12, %13 : vector<8x256xf32>
    %cst_9 = arith.constant 0.000000e+00 : f32
    %15 = vector.broadcast %cst_9 : f32 to vector<8x256xf32>
    %16 = arith.maximumf %14, %15 : vector<8x256xf32>
    %17 = tpu.iota {dimensions = array<i32: 0>} : vector<8x256xi32>
    %c4_i32 = arith.constant 4 : i32
    %18 = vector.broadcast %c4_i32 : i32 to vector<8x256xi32>
    %19 = arith.cmpi slt, %17, %18 : vector<8x256xi32>
    %cst_10 = arith.constant 0.000000e+00 : f32
    %20 = vector.broadcast %cst_10 : f32 to vector<8x256xf32>
    %21 = arith.select %19, %16, %20 : vector<8x256xi1>, vector<8x256xf32>
    %22 = vector.shape_cast %21 : vector<8x256xf32> to vector<1x8x256xf32>
    %cst_11 = arith.constant dense<0.000000e+00> : vector<1xf32>
    %23 = vector.multi_reduction <add>, %22, %cst_11 [1, 2] : vector<1x8x256xf32> to vector<1xf32>
    %24 = vector.shape_cast %23 : vector<1xf32> to vector<1x1x1xf32>
    %25 = vector.extract %24[0, 0, 0] : f32 from vector<1x1x1xf32>
    %cst_12 = arith.constant 1.250000e-03 : f32
    %26 = arith.mulf %25, %cst_12 : f32
    %c0_13 = arith.constant 0 : index
    %c0_14 = arith.constant 0 : index
    %27 = vector.load %arg6[%c0_13, %c0_14] : memref<1x256xf32, #tpu.memory_space<vmem>>, vector<1x256xf32>
    %c0_15 = arith.constant 0 : index
    %c0_16 = arith.constant 0 : index
    %28 = vector.load %arg7[%c0_15, %c0_16] : memref<1x256xf32, #tpu.memory_space<vmem>>, vector<1x256xf32>
    %29 = vector.broadcast %26 : f32 to vector<1x256xf32>
    %30 = arith.mulf %29, %28 : vector<1x256xf32>
    %31 = arith.subf %27, %30 : vector<1x256xf32>
    %c0_17 = arith.constant 0 : index
    %c0_18 = arith.constant 0 : index
    %32 = vector.load %arg5[%c0_17, %c0_18] : memref<256x256xf32, #tpu.memory_space<vmem>>, vector<256x256xf32>
    %cst_19 = arith.constant dense<0.000000e+00> : vector<8x256xf32>
    %33 = tpu.matmul %16, %32, %cst_19 {dimension_numbers = #tpu.dot_dimension_numbers<[1], [0], [0], [1], [0, 0, 1, 1], [], []>} : vector<8x256xf32>, vector<256x256xf32>, vector<8x256xf32> -> vector<8x256xf32>
    %34 = vector.broadcast %31 : vector<1x256xf32> to vector<8x256xf32>
    %35 = arith.addf %33, %34 : vector<8x256xf32>
    %cst_20 = arith.constant 0.000000e+00 : f32
    %36 = vector.broadcast %cst_20 : f32 to vector<8x256xf32>
    %37 = arith.maximumf %35, %36 : vector<8x256xf32>
    %c0_21 = arith.constant 0 : index
    %c0_22 = arith.constant 0 : index
    %38 = vector.load %arg10[%c0_21, %c0_22] : memref<8x256xf32, #tpu.memory_space<vmem>>, vector<8x256xf32>
    tpu.vector_store %arg10[%c0_21, %c0_22], %37 {strides = array<i32>} : memref<8x256xf32, #tpu.memory_space<vmem>>, vector<8x256xf32>,
    %c0_23 = arith.constant 0 : index
    %c0_24 = arith.constant 0 : index
    %39 = vector.load %arg8[%c0_23, %c0_24] : memref<256x128xf32, #tpu.memory_space<vmem>>, vector<256x128xf32>
    %cst_25 = arith.constant dense<0.000000e+00> : vector<8x128xf32>
    %40 = tpu.matmul %37, %39, %cst_25 {dimension_numbers = #tpu.dot_dimension_numbers<[1], [0], [0], [1], [0, 0, 1, 1], [], []>} : vector<8x256xf32>, vector<256x128xf32>, vector<8x128xf32> -> vector<8x128xf32>
    %c0_26 = arith.constant 0 : index
    %c0_27 = arith.constant 0 : index
    %41 = vector.load %arg9[%c0_26, %c0_27] : memref<1x128xf32, #tpu.memory_space<vmem>>, vector<1x128xf32>
    %42 = vector.broadcast %41 : vector<1x128xf32> to vector<8x128xf32>
    %43 = arith.addf %40, %42 : vector<8x128xf32>
    %cst_28 = arith.constant dense<0xFF800000> : vector<8xf32>
    %44 = vector.multi_reduction <maximumf>, %43, %cst_28 [1] : vector<8x128xf32> to vector<8xf32>
    %45 = vector.shape_cast %44 : vector<8xf32> to vector<8x1xf32>
    %46 = vector.broadcast %45 : vector<8x1xf32> to vector<8x128xf32>
    %47 = arith.subf %43, %46 : vector<8x128xf32>
    %48 = math.exp %47 : vector<8x128xf32>
    %cst_29 = arith.constant dense<0.000000e+00> : vector<8xf32>
    %49 = vector.multi_reduction <add>, %48, %cst_29 [1] : vector<8x128xf32> to vector<8xf32>
    %50 = vector.shape_cast %49 : vector<8xf32> to vector<8x1xf32>
    %51 = vector.broadcast %50 : vector<8x1xf32> to vector<8x128xf32>
    %52 = arith.divf %48, %51 : vector<8x128xf32>
    %c0_30 = arith.constant 0 : index
    %c0_31 = arith.constant 0 : index
    %53 = vector.load %arg11[%c0_30, %c0_31] : memref<8x128xf32, #tpu.memory_space<vmem>>, vector<8x128xf32>
    tpu.vector_store %arg11[%c0_30, %c0_31], %52 {strides = array<i32>} : memref<8x128xf32, #tpu.memory_space<vmem>>, vector<8x128xf32>,
    return
  }
  func.func @transform_0(%arg0: i32) -> (i32, i32) {
    %c0_i32 = arith.constant 0 : i32
    %c0_i32_0 = arith.constant 0 : i32
    %c0_i32_1 = arith.constant 0 : i32
    return %c0_i32, %c0_i32_0 : i32, i32
  }
  func.func @transform_1(%arg0: i32) -> (i32, i32) {
    %c0_i32 = arith.constant 0 : i32
    %c0_i32_0 = arith.constant 0 : i32
    %c0_i32_1 = arith.constant 0 : i32
    return %c0_i32, %c0_i32_0 : i32, i32
  }
  func.func @transform_2(%arg0: i32) -> (i32, i32) {
    %c0_i32 = arith.constant 0 : i32
    %c0_i32_0 = arith.constant 0 : i32
    %c0_i32_1 = arith.constant 0 : i32
    return %c0_i32, %c0_i32_0 : i32, i32
  }
  func.func @transform_3(%arg0: i32) -> (i32, i32) {
    %c0_i32 = arith.constant 0 : i32
    %c0_i32_0 = arith.constant 0 : i32
    %c0_i32_1 = arith.constant 0 : i32
    return %c0_i32, %c0_i32_0 : i32, i32
  }
  func.func @transform_4(%arg0: i32) -> (i32, i32) {
    %c0_i32 = arith.constant 0 : i32
    %c0_i32_0 = arith.constant 0 : i32
    %c0_i32_1 = arith.constant 0 : i32
    return %c0_i32, %c0_i32_0 : i32, i32
  }
  func.func @transform_5(%arg0: i32) -> (i32, i32) {
    %c0_i32 = arith.constant 0 : i32
    %c0_i32_0 = arith.constant 0 : i32
    %c0_i32_1 = arith.constant 0 : i32
    return %c0_i32, %c0_i32_0 : i32, i32
  }
  func.func @transform_6(%arg0: i32) -> (i32, i32) {
    %c0_i32 = arith.constant 0 : i32
    %c0_i32_0 = arith.constant 0 : i32
    %c0_i32_1 = arith.constant 0 : i32
    return %c0_i32, %c0_i32_0 : i32, i32
  }
  func.func @transform_7(%arg0: i32) -> (i32, i32) {
    %c0_i32 = arith.constant 0 : i32
    %c0_i32_0 = arith.constant 0 : i32
    %c0_i32_1 = arith.constant 0 : i32
    return %c0_i32, %c0_i32_0 : i32, i32
  }
  func.func @transform_8(%arg0: i32) -> (i32, i32) {
    %c0_i32 = arith.constant 0 : i32
    %c0_i32_0 = arith.constant 0 : i32
    %c0_i32_1 = arith.constant 0 : i32
    return %c0_i32, %c0_i32_0 : i32, i32
  }
  func.func @transform_9(%arg0: i32) -> (i32, i32) {
    %c0_i32 = arith.constant 0 : i32
    %c0_i32_0 = arith.constant 0 : i32
    %c0_i32_1 = arith.constant 0 : i32
    return %c0_i32, %c0_i32_0 : i32, i32
  }
  func.func @transform_10(%arg0: i32) -> (i32, i32) {
    %c0_i32 = arith.constant 0 : i32
    %c0_i32_0 = arith.constant 0 : i32
    %c0_i32_1 = arith.constant 0 : i32
    return %c0_i32, %c0_i32_0 : i32, i32
  }
}

</mosaic_0001>

<llo_original>
// kernel: multi_layer_classifier.1
$region0: #{multi_layer_classifier.1}
  #allocation0 [shape = 'u32[]', space=smem, size = 0x4, offset = 0x4, fixed_abs, tag = 'smem constant byte address 0x4 - core index']
  #allocation1 [shape = 'u32[72,128]{1,0:T(1,128)}', space=vmem, size = 0x9000, scoped, tag = 'internal scratch']
  %s0 = inlined_call_operand.vmem [shape: f32[8,128], index: 0, kind: input, shape index: {}]
  %s1 = inlined_call_operand.hbm [shape: f32[128,256], index: 1, kind: input, shape index: {}]
  %s2 = inlined_call_operand.vmem [shape: f32[1,256], index: 2, kind: input, shape index: {}]
  %s3 = inlined_call_operand.vmem [shape: f32[1,256], index: 3, kind: input, shape index: {}]
  %s4 = inlined_call_operand.hbm [shape: f32[256,256], index: 4, kind: input, shape index: {}]
  %s5 = inlined_call_operand.vmem [shape: f32[1,256], index: 5, kind: input, shape index: {}]
  %s6 = inlined_call_operand.vmem [shape: f32[1,256], index: 6, kind: input, shape index: {}]
  %s7 = inlined_call_operand.hbm [shape: f32[256,128], index: 7, kind: input, shape index: {}]
  %s8 = inlined_call_operand.vmem [shape: f32[1,128], index: 8, kind: input, shape index: {}]
  %s9 = inlined_call_operand.vmem [shape: f32[8,256], index: 9, kind: output, shape index: {0}]
  %s10 = inlined_call_operand.vmem [shape: f32[8,128], index: 10, kind: output, shape index: {1}]
  %11 = xla_tuple %s9, %s10
  %s12 = sld [smem:[#allocation0]]
  $region66: #{multi_layer_classifier.1} parent=0
    _
  %s14 = ssub.s32 1, %s12
  %s15 = scalar_select 0, %s14, %s12
  $region1: #{multi_layer_classifier.1} parent=0
    #allocation2 [shape = 'u8[131072]{0}', space=vmem, size = 0x20000, scoped, tag = 'input window, operand 1, single buffered']
    #allocation3 [shape = 's32[1]{0}', space=sflag, size = 0x4, scoped, tag = 'scoped memory for multi_layer_classifier.1']
    #allocation4 [shape = 'u8[262144]{0}', space=vmem, size = 0x40000, scoped, tag = 'input window, operand 4, single buffered']
    #allocation5 [shape = 's32[1]{0}', space=sflag, size = 0x4, scoped, tag = 'scoped memory for multi_layer_classifier.1']
    #allocation6 [shape = 'u8[131072]{0}', space=vmem, size = 0x20000, scoped, tag = 'input window, operand 7, single buffered']
    %16 = vsyncpa [#allocation3], 0
    %17 = vsyncpa [#allocation5], 0
    // Predicated region
    $region2: #{multi_layer_classifier.1} parent=1 // pred_check
      _
    $region3: #{multi_layer_classifier.1} parent=1 // pred_check_branch
      %19 = sbr.rel (0) target = $region5
    $region4: #{multi_layer_classifier.1} parent=1 // pred_region
      _
    $region5: #{multi_layer_classifier.1} parent=1 // pred_fallthru
      _
    // Predicated region
    $region6: #{multi_layer_classifier.1} parent=1 // pred_check
      _
    $region7: #{multi_layer_classifier.1} parent=1 // pred_check_branch
      %21 = sbr.rel (0) target = $region9
    $region8: #{multi_layer_classifier.1} parent=1 // pred_region
      %23 = vsyncadd [#allocation3], 0
      %s24 = sshll.u32 %s1, 4
      %s25 = int_to_ptr.hbm [resolvable:$true] %s24
      %s26 = sshll.u32 [#allocation2], 4
      %s27 = int_to_ptr.vmem [resolvable:$true] %s26
      %32 = dma.hbm_to_vmem [thread:$0]  %s25, 4096, %s27, [#allocation3], 256, 256, 16
    $region9: #{multi_layer_classifier.1} parent=1 // pred_fallthru
      _
    // Predicated region
    $region10: #{multi_layer_classifier.1} parent=1 // pred_check
      _
    $region11: #{multi_layer_classifier.1} parent=1 // pred_check_branch
      %34 = sbr.rel (0) target = $region13
    $region12: #{multi_layer_classifier.1} parent=1 // pred_region
      _
    $region13: #{multi_layer_classifier.1} parent=1 // pred_fallthru
      _
    // Predicated region
    $region14: #{multi_layer_classifier.1} parent=1 // pred_check
      _
    $region15: #{multi_layer_classifier.1} parent=1 // pred_check_branch
      %36 = sbr.rel (0) target = $region17
    $region16: #{multi_layer_classifier.1} parent=1 // pred_region
      _
    $region17: #{multi_layer_classifier.1} parent=1 // pred_fallthru
      _
    // Predicated region
    $region18: #{multi_layer_classifier.1} parent=1 // pred_check
      _
    $region19: #{multi_layer_classifier.1} parent=1 // pred_check_branch
      %38 = sbr.rel (0) target = $region21
    $region20: #{multi_layer_classifier.1} parent=1 // pred_region
      %40 = vsyncadd [#allocation5], 0
      %s41 = sshll.u32 %s4, 4
      %s42 = int_to_ptr.hbm [resolvable:$true] %s41
      %s43 = sshll.u32 [#allocation4], 4
      %s44 = int_to_ptr.vmem [resolvable:$true] %s43
      %49 = dma.hbm_to_vmem [thread:$0]  %s42, 8192, %s44, [#allocation5], 256, 256, 16
    $region21: #{multi_layer_classifier.1} parent=1 // pred_fallthru
      _
    // Predicated region
    $region22: #{multi_layer_classifier.1} parent=1 // pred_check
      _
    $region23: #{multi_layer_classifier.1} parent=1 // pred_check_branch
      %51 = sbr.rel (0) target = $region25
    $region24: #{multi_layer_classifier.1} parent=1 // pred_region
      _
    $region25: #{multi_layer_classifier.1} parent=1 // pred_fallthru
      _
    // Predicated region
    $region26: #{multi_layer_classifier.1} parent=1 // pred_check
      _
    $region27: #{multi_layer_classifier.1} parent=1 // pred_check_branch
      %53 = sbr.rel (0) target = $region29
    $region28: #{multi_layer_classifier.1} parent=1 // pred_region
      _
    $region29: #{multi_layer_classifier.1} parent=1 // pred_fallthru
      _
    // Predicated region
    $region30: #{multi_layer_classifier.1} parent=1 // pred_check
      _
    $region31: #{multi_layer_classifier.1} parent=1 // pred_check_branch
      %55 = sbr.rel (0) target = $region33
    $region32: #{multi_layer_classifier.1} parent=1 // pred_region
      %57 = vsyncadd [#allocation5], 0
      %s58 = sshll.u32 %s7, 4
      %s59 = int_to_ptr.hbm [resolvable:$true] %s58
      %s60 = sshll.u32 [#allocation6], 4
      %s61 = int_to_ptr.vmem [resolvable:$true] %s60
      %66 = dma.hbm_to_vmem [thread:$0]  %s59, 4096, %s61, [#allocation5], 128, 128, 8
    $region33: #{multi_layer_classifier.1} parent=1 // pred_fallthru
      _
    // Predicated region
    $region34: #{multi_layer_classifier.1} parent=1 // pred_check
      _
    $region35: #{multi_layer_classifier.1} parent=1 // pred_check_branch
      %68 = sbr.rel (0) target = $region37
    $region36: #{multi_layer_classifier.1} parent=1 // pred_region
      _
    $region37: #{multi_layer_classifier.1} parent=1 // pred_fallthru
      _
    // Predicated region
    $region38: #{multi_layer_classifier.1} parent=1 // pred_check
      _
    $region39: #{multi_layer_classifier.1} parent=1 // pred_check_branch
      %70 = sbr.rel (0) target = $region41
    $region40: #{multi_layer_classifier.1} parent=1 // pred_region
      %72 = dma.done [#allocation3], 4096
    $region41: #{multi_layer_classifier.1} parent=1 // pred_fallthru
      _
    // Predicated region
    $region42: #{multi_layer_classifier.1} parent=1 // pred_check
      _
    $region43: #{multi_layer_classifier.1} parent=1 // pred_check_branch
      %74 = sbr.rel (0) target = $region45
    $region44: #{multi_layer_classifier.1} parent=1 // pred_region
      %76 = dma.done [#allocation5], 8192
    $region45: #{multi_layer_classifier.1} parent=1 // pred_fallthru
      _
    // Predicated region
    $region46: #{multi_layer_classifier.1} parent=1 // pred_check
      _
    $region47: #{multi_layer_classifier.1} parent=1 // pred_check_branch
      %78 = sbr.rel (0) target = $region49
    $region48: #{multi_layer_classifier.1} parent=1 // pred_region
      %80 = dma.done [#allocation5], 4096
    $region49: #{multi_layer_classifier.1} parent=1 // pred_fallthru
      _
    %v81 = vld [vmem:[%s0] sm:$0xff]
    %82 = vadd.xlane.f32.xlu0 %v81
    %v83 = vpop.xlane.xlu0 %82
    %v84 = vrot.slane %v83, 4
    %v85 = vadd.f32 %v83, %v84
    %v86 = vrot.slane %v85, 2
    %v87 = vadd.f32 %v85, %v86
    %v88 = vrot.slane %v87, 1
    %v89 = vadd.f32 %v87, %v88
    %s90 = vtos %v89
    %s91 = smul.f32 %s90, 0.0078125
    %v92 = vld [vmem:[%s2] sm:$0x3]
    %v93 = vld [vmem:[%s3] sm:$0x3]
    %v94 = vstv %s91
    %v95 = vmul.f32 %v94, %v93
    %v96 = vsub.f32 %v92, %v95
    %v97 = vld [vmem:[#allocation2] sm:$0xff]
    %v98 = vld [vmem:[#allocation2 + $0x8] sm:$0xff]
    %v99 = vld [vmem:[#allocation2 + $0x10] sm:$0xff]
    %v100 = vld [vmem:[#allocation2 + $0x18] sm:$0xff]
    %v101 = vld [vmem:[#allocation2 + $0x20] sm:$0xff]
    %v102 = vld [vmem:[#allocation2 + $0x28] sm:$0xff]
    %v103 = vld [vmem:[#allocation2 + $0x30] sm:$0xff]
    %v104 = vld [vmem:[#allocation2 + $0x38] sm:$0xff]
    %v105 = vld [vmem:[#allocation2 + $0x40] sm:$0xff]
    %v106 = vld [vmem:[#allocation2 + $0x48] sm:$0xff]
    %v107 = vld [vmem:[#allocation2 + $0x50] sm:$0xff]
    %v108 = vld [vmem:[#allocation2 + $0x58] sm:$0xff]
    %v109 = vld [vmem:[#allocation2 + $0x60] sm:$0xff]
    %v110 = vld [vmem:[#allocation2 + $0x68] sm:$0xff]
    %v111 = vld [vmem:[#allocation2 + $0x70] sm:$0xff]
    %v112 = vld [vmem:[#allocation2 + $0x78] sm:$0xff]
    %v113 = vld [vmem:[#allocation2 + $0x80] sm:$0xff]
    %v114 = vld [vmem:[#allocation2 + $0x88] sm:$0xff]
    %v115 = vld [vmem:[#allocation2 + $0x90] sm:$0xff]
    %v116 = vld [vmem:[#allocation2 + $0x98] sm:$0xff]
    %v117 = vld [vmem:[#allocation2 + $0xa0] sm:$0xff]
    %v118 = vld [vmem:[#allocation2 + $0xa8] sm:$0xff]
    %v119 = vld [vmem:[#allocation2 + $0xb0] sm:$0xff]
    %v120 = vld [vmem:[#allocation2 + $0xb8] sm:$0xff]
    %v121 = vld [vmem:[#allocation2 + $0xc0] sm:$0xff]
    %v122 = vld [vmem:[#allocation2 + $0xc8] sm:$0xff]
    %v123 = vld [vmem:[#allocation2 + $0xd0] sm:$0xff]
    %v124 = vld [vmem:[#allocation2 + $0xd8] sm:$0xff]
    %v125 = vld [vmem:[#allocation2 + $0xe0] sm:$0xff]
    %v126 = vld [vmem:[#allocation2 + $0xe8] sm:$0xff]
    %v127 = vld [vmem:[#allocation2 + $0xf0] sm:$0xff]
    %v128 = vld [vmem:[#allocation2 + $0xf8] sm:$0xff]
    %v130 = vperm.slane %v96, 0
    %v131 = vperm.slane %v96, 1
    %134 = vmatpush.msra.mxu0 %v127
    %135 = vmatpush.msra.mxu0 %v125
    %136 = vmatpush.msra.mxu0 %v123
    %137 = vmatpush.msra.mxu0 %v121
    %138 = vmatpush.msra.mxu0 %v119
    %139 = vmatpush.msra.mxu0 %v117
    %140 = vmatpush.msra.mxu0 %v115
    %141 = vmatpush.msra.mxu0 %v113
    %142 = vmatpush.msra.mxu0 %v111
    %143 = vmatpush.msra.mxu0 %v109
    %144 = vmatpush.msra.mxu0 %v107
    %145 = vmatpush.msra.mxu0 %v105
    %146 = vmatpush.msra.mxu0 %v103
    %147 = vmatpush.msra.mxu0 %v101
    %148 = vmatpush.msra.mxu0 %v99
    %149 = vmatpush.msra.mxu0 %v97
    %150 = vmatmul.f32.gmra.mxu0 %v81
    %v151 = vpop.f32.mrf.mxu0
    %v152 = vadd.f32 %v130, %v151
    %153 = vdwg.mxu0
    %154 = vmatpush.msra.mxu0 %v128
    %155 = vmatpush.msra.mxu0 %v126
    %156 = vmatpush.msra.mxu0 %v124
    %157 = vmatpush.msra.mxu0 %v122
    %158 = vmatpush.msra.mxu0 %v120
    %159 = vmatpush.msra.mxu0 %v118
    %160 = vmatpush.msra.mxu0 %v116
    %161 = vmatpush.msra.mxu0 %v114
    %162 = vmatpush.msra.mxu0 %v112
    %163 = vmatpush.msra.mxu0 %v110
    %164 = vmatpush.msra.mxu0 %v108
    %165 = vmatpush.msra.mxu0 %v106
    %166 = vmatpush.msra.mxu0 %v104
    %167 = vmatpush.msra.mxu0 %v102
    %168 = vmatpush.msra.mxu0 %v100
    %169 = vmatpush.msra.mxu0 %v98
    %170 = vmatmul.f32.gmra.mxu0 %v81
    %v171 = vpop.f32.mrf.mxu0
    %v172 = vadd.f32 %v131, %v171
    %173 = vdwg.mxu0
    %v174 = vmax.f32 %v152, 0.0
    %v175 = vmax.f32 %v172, 0.0
    %v176 = vlaneseq
    %v177 = vshrl.u32 %v176, 7
    %vm178 = vcmp.lt.s32.totalorder %v177, 4
    %v179 = vsel %vm178, %v174, 0.0
    %v180 = vsel %vm178, %v175, 0.0
    %v181 = vadd.f32 %v179, %v180
    %182 = vadd.xlane.f32.xlu0 %v181
    %v183 = vpop.xlane.xlu0 %182
    %v184 = vrot.slane %v183, 4
    %v185 = vadd.f32 %v183, %v184
    %v186 = vrot.slane %v185, 2
    %v187 = vadd.f32 %v185, %v186
    %v188 = vrot.slane %v187, 1
    %v189 = vadd.f32 %v187, %v188
    %s190 = vtos %v189
    %s191 = smul.f32 %s190, 0.00125
    %v192 = vld [vmem:[%s5] sm:$0x3]
    %v193 = vld [vmem:[%s6] sm:$0x3]
    %v194 = vstv %s191
    %v195 = vmul.f32 %v194, %v193
    %v196 = vsub.f32 %v192, %v195
    %v197 = vld [vmem:[#allocation4] sm:$0xff]
    %v198 = vld [vmem:[#allocation4 + $0x8] sm:$0xff]
    %v199 = vld [vmem:[#allocation4 + $0x10] sm:$0xff]
    %v200 = vld [vmem:[#allocation4 + $0x18] sm:$0xff]
    %v201 = vld [vmem:[#allocation4 + $0x20] sm:$0xff]
    %v202 = vld [vmem:[#allocation4 + $0x28] sm:$0xff]
    %v203 = vld [vmem:[#allocation4 + $0x30] sm:$0xff]
    %v204 = vld [vmem:[#allocation4 + $0x38] sm:$0xff]
    %v205 = vld [vmem:[#allocation4 + $0x40] sm:$0xff]
    %v206 = vld [vmem:[#allocation4 + $0x48] sm:$0xff]
    %v207 = vld [vmem:[#allocation4 + $0x50] sm:$0xff]
    %v208 = vld [vmem:[#allocation4 + $0x58] sm:$0xff]
    %v209 = vld [vmem:[#allocation4 + $0x60] sm:$0xff]
    %v210 = vld [vmem:[#allocation4 + $0x68] sm:$0xff]
    %v211 = vld [vmem:[#allocation4 + $0x70] sm:$0xff]
    %v212 = vld [vmem:[#allocation4 + $0x78] sm:$0xff]
    %v213 = vld [vmem:[#allocation4 + $0x80] sm:$0xff]
    %v214 = vld [vmem:[#allocation4 + $0x88] sm:$0xff]
    %v215 = vld [vmem:[#allocation4 + $0x90] sm:$0xff]
    %v216 = vld [vmem:[#allocation4 + $0x98] sm:$0xff]
    %v217 = vld [vmem:[#allocation4 + $0xa0] sm:$0xff]
    %v218 = vld [vmem:[#allocation4 + $0xa8] sm:$0xff]
    %v219 = vld [vmem:[#allocation4 + $0xb0] sm:$0xff]
    %v220 = vld [vmem:[#allocation4 + $0xb8] sm:$0xff]
    %v221 = vld [vmem:[#allocation4 + $0xc0] sm:$0xff]
    %v222 = vld [vmem:[#allocation4 + $0xc8] sm:$0xff]
    %v223 = vld [vmem:[#allocation4 + $0xd0] sm:$0xff]
    %v224 = vld [vmem:[#allocation4 + $0xd8] sm:$0xff]
    %v225 = vld [vmem:[#allocation4 + $0xe0] sm:$0xff]
    %v226 = vld [vmem:[#allocation4 + $0xe8] sm:$0xff]
    %v227 = vld [vmem:[#allocation4 + $0xf0] sm:$0xff]
    %v228 = vld [vmem:[#allocation4 + $0xf8] sm:$0xff]
    %v229 = vld [vmem:[#allocation4 + $0x100] sm:$0xff]
    %v230 = vld [vmem:[#allocation4 + $0x108] sm:$0xff]
    %v231 = vld [vmem:[#allocation4 + $0x110] sm:$0xff]
    %v232 = vld [vmem:[#allocation4 + $0x118] sm:$0xff]
    %v233 = vld [vmem:[#allocation4 + $0x120] sm:$0xff]
    %v234 = vld [vmem:[#allocation4 + $0x128] sm:$0xff]
    %v235 = vld [vmem:[#allocation4 + $0x130] sm:$0xff]
    %v236 = vld [vmem:[#allocation4 + $0x138] sm:$0xff]
    %v237 = vld [vmem:[#allocation4 + $0x140] sm:$0xff]
    %v238 = vld [vmem:[#allocation4 + $0x148] sm:$0xff]
    %v239 = vld [vmem:[#allocation4 + $0x150] sm:$0xff]
    %v240 = vld [vmem:[#allocation4 + $0x158] sm:$0xff]
    %v241 = vld [vmem:[#allocation4 + $0x160] sm:$0xff]
    %v242 = vld [vmem:[#allocation4 + $0x168] sm:$0xff]
    %v243 = vld [vmem:[#allocation4 + $0x170] sm:$0xff]
    %v244 = vld [vmem:[#allocation4 + $0x178] sm:$0xff]
    %v245 = vld [vmem:[#allocation4 + $0x180] sm:$0xff]
    %v246 = vld [vmem:[#allocation4 + $0x188] sm:$0xff]
    %v247 = vld [vmem:[#allocation4 + $0x190] sm:$0xff]
    %v248 = vld [vmem:[#allocation4 + $0x198] sm:$0xff]
    %v249 = vld [vmem:[#allocation4 + $0x1a0] sm:$0xff]
    %v250 = vld [vmem:[#allocation4 + $0x1a8] sm:$0xff]
    %v251 = vld [vmem:[#allocation4 + $0x1b0] sm:$0xff]
    %v252 = vld [vmem:[#allocation4 + $0x1b8] sm:$0xff]
    %v253 = vld [vmem:[#allocation4 + $0x1c0] sm:$0xff]
    %v254 = vld [vmem:[#allocation4 + $0x1c8] sm:$0xff]
    %v255 = vld [vmem:[#allocation4 + $0x1d0] sm:$0xff]
    %v256 = vld [vmem:[#allocation4 + $0x1d8] sm:$0xff]
    %v257 = vld [vmem:[#allocation4 + $0x1e0] sm:$0xff]
    %v258 = vld [vmem:[#allocation4 + $0x1e8] sm:$0xff]
    %v259 = vld [vmem:[#allocation4 + $0x1f0] sm:$0xff]
    %v260 = vld [vmem:[#allocation4 + $0x1f8] sm:$0xff]
    %v262 = vperm.slane %v196, 0
    %v263 = vperm.slane %v196, 1
    %266 = vmatpush.msra.mxu0 %v227
    %267 = vmatpush.msra.mxu0 %v225
    %268 = vmatpush.msra.mxu0 %v223
    %269 = vmatpush.msra.mxu0 %v221
    %270 = vmatpush.msra.mxu0 %v219
    %271 = vmatpush.msra.mxu0 %v217
    %272 = vmatpush.msra.mxu0 %v215
    %273 = vmatpush.msra.mxu0 %v213
    %274 = vmatpush.msra.mxu0 %v211
    %275 = vmatpush.msra.mxu0 %v209
    %276 = vmatpush.msra.mxu0 %v207
    %277 = vmatpush.msra.mxu0 %v205
    %278 = vmatpush.msra.mxu0 %v203
    %279 = vmatpush.msra.mxu0 %v201
    %280 = vmatpush.msra.mxu0 %v199
    %281 = vmatpush.msra.mxu0 %v197
    %282 = vmatmul.f32.gmra.mxu0 %v174
    %v283 = vpop.f32.mrf.mxu0
    %v284 = vadd.f32 %v262, %v283
    %285 = vdwg.mxu0
    %286 = vmatpush.msra.mxu0 %v259
    %287 = vmatpush.msra.mxu0 %v257
    %288 = vmatpush.msra.mxu0 %v255
    %289 = vmatpush.msra.mxu0 %v253
    %290 = vmatpush.msra.mxu0 %v251
    %291 = vmatpush.msra.mxu0 %v249
    %292 = vmatpush.msra.mxu0 %v247
    %293 = vmatpush.msra.mxu0 %v245
    %294 = vmatpush.msra.mxu0 %v243
    %295 = vmatpush.msra.mxu0 %v241
    %296 = vmatpush.msra.mxu0 %v239
    %297 = vmatpush.msra.mxu0 %v237
    %298 = vmatpush.msra.mxu0 %v235
    %299 = vmatpush.msra.mxu0 %v233
    %300 = vmatpush.msra.mxu0 %v231
    %301 = vmatpush.msra.mxu0 %v229
    %302 = vmatmul.f32.gmra.mxu0 %v175
    %v303 = vpop.f32.mrf.mxu0
    %v304 = vadd.f32 %v284, %v303
    %305 = vdwg.mxu0
    %306 = vmatpush.msra.mxu0 %v228
    %307 = vmatpush.msra.mxu0 %v226
    %308 = vmatpush.msra.mxu0 %v224
    %309 = vmatpush.msra.mxu0 %v222
    %310 = vmatpush.msra.mxu0 %v220
    %311 = vmatpush.msra.mxu0 %v218
    %312 = vmatpush.msra.mxu0 %v216
    %313 = vmatpush.msra.mxu0 %v214
    %314 = vmatpush.msra.mxu0 %v212
    %315 = vmatpush.msra.mxu0 %v210
    %316 = vmatpush.msra.mxu0 %v208
    %317 = vmatpush.msra.mxu0 %v206
    %318 = vmatpush.msra.mxu0 %v204
    %319 = vmatpush.msra.mxu0 %v202
    %320 = vmatpush.msra.mxu0 %v200
    %321 = vmatpush.msra.mxu0 %v198
    %322 = vmatmul.f32.gmra.mxu0 %v174
    %v323 = vpop.f32.mrf.mxu0
    %v324 = vadd.f32 %v263, %v323
    %325 = vdwg.mxu0
    %326 = vmatpush.msra.mxu0 %v260
    %327 = vmatpush.msra.mxu0 %v258
    %328 = vmatpush.msra.mxu0 %v256
    %329 = vmatpush.msra.mxu0 %v254
    %330 = vmatpush.msra.mxu0 %v252
    %331 = vmatpush.msra.mxu0 %v250
    %332 = vmatpush.msra.mxu0 %v248
    %333 = vmatpush.msra.mxu0 %v246
    %334 = vmatpush.msra.mxu0 %v244
    %335 = vmatpush.msra.mxu0 %v242
    %336 = vmatpush.msra.mxu0 %v240
    %337 = vmatpush.msra.mxu0 %v238
    %338 = vmatpush.msra.mxu0 %v236
    %339 = vmatpush.msra.mxu0 %v234
    %340 = vmatpush.msra.mxu0 %v232
    %341 = vmatpush.msra.mxu0 %v230
    %342 = vmatmul.f32.gmra.mxu0 %v175
    %v343 = vpop.f32.mrf.mxu0
    %v344 = vadd.f32 %v324, %v343
    %345 = vdwg.mxu0
    %v346 = vmax.f32 %v304, 0.0
    %v347 = vmax.f32 %v344, 0.0
    %348 = vst [vmem:[%s9] sm:$0xff] %v346
    %349 = vst [vmem:[%s9 + $0x8] sm:$0xff] %v347
    %v350 = vld [vmem:[#allocation6] sm:$0xff]
    %v351 = vld [vmem:[#allocation6 + $0x8] sm:$0xff]
    %v352 = vld [vmem:[#allocation6 + $0x10] sm:$0xff]
    %v353 = vld [vmem:[#allocation6 + $0x18] sm:$0xff]
    %v354 = vld [vmem:[#allocation6 + $0x20] sm:$0xff]
    %v355 = vld [vmem:[#allocation6 + $0x28] sm:$0xff]
    %v356 = vld [vmem:[#allocation6 + $0x30] sm:$0xff]
    %v357 = vld [vmem:[#allocation6 + $0x38] sm:$0xff]
    %v358 = vld [vmem:[#allocation6 + $0x40] sm:$0xff]
    %v359 = vld [vmem:[#allocation6 + $0x48] sm:$0xff]
    %v360 = vld [vmem:[#allocation6 + $0x50] sm:$0xff]
    %v361 = vld [vmem:[#allocation6 + $0x58] sm:$0xff]
    %v362 = vld [vmem:[#allocation6 + $0x60] sm:$0xff]
    %v363 = vld [vmem:[#allocation6 + $0x68] sm:$0xff]
    %v364 = vld [vmem:[#allocation6 + $0x70] sm:$0xff]
    %v365 = vld [vmem:[#allocation6 + $0x78] sm:$0xff]
    %v366 = vld [vmem:[#allocation6 + $0x80] sm:$0xff]
    %v367 = vld [vmem:[#allocation6 + $0x88] sm:$0xff]
    %v368 = vld [vmem:[#allocation6 + $0x90] sm:$0xff]
    %v369 = vld [vmem:[#allocation6 + $0x98] sm:$0xff]
    %v370 = vld [vmem:[#allocation6 + $0xa0] sm:$0xff]
    %v371 = vld [vmem:[#allocation6 + $0xa8] sm:$0xff]
    %v372 = vld [vmem:[#allocation6 + $0xb0] sm:$0xff]
    %v373 = vld [vmem:[#allocation6 + $0xb8] sm:$0xff]
    %v374 = vld [vmem:[#allocation6 + $0xc0] sm:$0xff]
    %v375 = vld [vmem:[#allocation6 + $0xc8] sm:$0xff]
    %v376 = vld [vmem:[#allocation6 + $0xd0] sm:$0xff]
    %v377 = vld [vmem:[#allocation6 + $0xd8] sm:$0xff]
    %v378 = vld [vmem:[#allocation6 + $0xe0] sm:$0xff]
    %v379 = vld [vmem:[#allocation6 + $0xe8] sm:$0xff]
    %v380 = vld [vmem:[#allocation6 + $0xf0] sm:$0xff]
    %v381 = vld [vmem:[#allocation6 + $0xf8] sm:$0xff]
    %v382 = vld [vmem:[%s8] sm:$0x1]
    %v384 = vperm.slane %v382, 0
    %386 = vmatpush.msra.mxu0 %v365
    %387 = vmatpush.msra.mxu0 %v364
    %388 = vmatpush.msra.mxu0 %v363
    %389 = vmatpush.msra.mxu0 %v362
    %390 = vmatpush.msra.mxu0 %v361
    %391 = vmatpush.msra.mxu0 %v360
    %392 = vmatpush.msra.mxu0 %v359
    %393 = vmatpush.msra.mxu0 %v358
    %394 = vmatpush.msra.mxu0 %v357
    %395 = vmatpush.msra.mxu0 %v356
    %396 = vmatpush.msra.mxu0 %v355
    %397 = vmatpush.msra.mxu0 %v354
    %398 = vmatpush.msra.mxu0 %v353
    %399 = vmatpush.msra.mxu0 %v352
    %400 = vmatpush.msra.mxu0 %v351
    %401 = vmatpush.msra.mxu0 %v350
    %402 = vmatmul.f32.gmra.mxu0 %v346
    %v403 = vpop.f32.mrf.mxu0
    %v404 = vadd.f32 %v384, %v403
    %405 = vdwg.mxu0
    %406 = vmatpush.msra.mxu0 %v381
    %407 = vmatpush.msra.mxu0 %v380
    %408 = vmatpush.msra.mxu0 %v379
    %409 = vmatpush.msra.mxu0 %v378
    %410 = vmatpush.msra.mxu0 %v377
    %411 = vmatpush.msra.mxu0 %v376
    %412 = vmatpush.msra.mxu0 %v375
    %413 = vmatpush.msra.mxu0 %v374
    %414 = vmatpush.msra.mxu0 %v373
    %415 = vmatpush.msra.mxu0 %v372
    %416 = vmatpush.msra.mxu0 %v371
    %417 = vmatpush.msra.mxu0 %v370
    %418 = vmatpush.msra.mxu0 %v369
    %419 = vmatpush.msra.mxu0 %v368
    %420 = vmatpush.msra.mxu0 %v367
    %421 = vmatpush.msra.mxu0 %v366
    %422 = vmatmul.f32.gmra.mxu0 %v347
    %v423 = vpop.f32.mrf.mxu0
    %v424 = vadd.f32 %v404, %v423
    %425 = vdwg.mxu0
    %426 = vmax.xlane.f32.xlu0 %v424
    %v427 = vpop.xlane.xlu0 %426
    %v428 = vsub.f32 %v424, %v427
    %v429 = vmul.f32 %v428, 1.442695
    %v430 = vpow.pop %v429
    %431 = vadd.xlane.f32.xlu0 %v430
    %v432 = vpop.xlane.xlu0 %431
    %v433 = vrcp.pop %v432
    %v434 = vmul.f32 %v432, %v433
    %v435 = vsub.f32 1.0, %v434
    %v436 = vmul.f32 %v433, %v435
    %v437 = vadd.f32 %v433, %v436
    %vm438 = vweird.f32 %v432
    %vm439 = vweird.f32 %v433
    %vm440 = vmor %vm438, %vm439
    %v441 = vsel %vm440, %v433, %v437
    %v442 = vand.u32 2147483647, %v432
    %vm443 = vcmp.eq.f32.partialorder %v442, 8.507059e+37
    %v444 = vand.u32 %v432, 2147483648
    %v445 = vor.u32 1.1754944e-38, %v444
    %v446 = vsel %vm443, %v445, %v441
    %v447 = vmul.f32 %v430, %v446
    %448 = vst [vmem:[%s10] sm:$0xff] %v447
    // Predicated region
    $region50: #{multi_layer_classifier.1} parent=1 // pred_check
      _
    $region51: #{multi_layer_classifier.1} parent=1 // pred_check_branch
      %450 = sbr.rel (0) target = $region53
    $region52: #{multi_layer_classifier.1} parent=1 // pred_region
      _
    $region53: #{multi_layer_classifier.1} parent=1 // pred_fallthru
      _
    // Predicated region
    $region54: #{multi_layer_classifier.1} parent=1 // pred_check
      _
    $region55: #{multi_layer_classifier.1} parent=1 // pred_check_branch
      %452 = sbr.rel (0) target = $region57
    $region56: #{multi_layer_classifier.1} parent=1 // pred_region
      _
    $region57: #{multi_layer_classifier.1} parent=1 // pred_fallthru
      _
    // Predicated region
    $region58: #{multi_layer_classifier.1} parent=1 // pred_check
      _
    $region59: #{multi_layer_classifier.1} parent=1 // pred_check_branch
      %454 = sbr.rel (0) target = $region61
    $region60: #{multi_layer_classifier.1} parent=1 // pred_region
      _
    $region61: #{multi_layer_classifier.1} parent=1 // pred_fallthru
      _
    // Predicated region
    $region62: #{multi_layer_classifier.1} parent=1 // pred_check
      _
    $region63: #{multi_layer_classifier.1} parent=1 // pred_check_branch
      %456 = sbr.rel (0) target = $region65
    $region64: #{multi_layer_classifier.1} parent=1 // pred_region
      _
    $region65: #{multi_layer_classifier.1} parent=1 // pred_fallthru
      _
    %457 = vsyncpa [#allocation3], 1
    %458 = vsyncpa [#allocation5], 1

</llo_original>
